<compile_context>
chip_gen: v5e
topology: v5e:2x2
jax: 0.10.0
libtpu: 0.0.40
codegen_flags: <defaults>
</compile_context>

<pallas_src>
import jax
import jax.numpy as jnp
from jax.experimental import pallas as pl
from jax.experimental.pallas import tpu as pltpu


def _smooth_loss_kernel(flow_ref, img_ref, out_x_ref, out_y_ref):
    # flow_ref: (1, 2, P, H, W) block; img_ref: (1, Ci, P, H, W) block.
    # out_x_ref: (1, 1, H-1, W) resident f32 partial sums (H-direction).
    # out_y_ref: (1, 1, H, W-1) resident f32 partial sums (W-direction).
    t = pl.program_id(2)

    @pl.when(t == 0)
    def _init():
        out_x_ref[...] = jnp.zeros_like(out_x_ref)
        out_y_ref[...] = jnp.zeros_like(out_y_ref)

    f = flow_ref[0]    # (2, P, H, W)  native dtype
    im = img_ref[0]    # (Ci, P, H, W) native dtype

    # ---- H-direction (x) path first, W-direction (y) after: halves the peak
    # live f32 temp footprint per plane.
    gx_im = jnp.abs(im[:, :, :-1, :] - im[:, :, 1:, :])            # (Ci,P,H-1,W)
    wx = jnp.exp(-jnp.mean(gx_im.astype(jnp.float32), axis=0))     # (P,H-1,W), EUP
    gx_f = jnp.abs(f[:, :, :-1, :] - f[:, :, 1:, :])               # (2,P,H-1,W)
    gx_sum = jnp.sum(gx_f.astype(jnp.float32), axis=0)             # fused channel add
    out_x_ref[...] += jnp.sum(gx_sum * wx, axis=0)[None, None]     # reduce over P

    gy_im = jnp.abs(im[:, :, :, :-1] - im[:, :, :, 1:])            # (Ci,P,H,W-1)
    wy = jnp.exp(-jnp.mean(gy_im.astype(jnp.float32), axis=0))     # (P,H,W-1)
    gy_f = jnp.abs(f[:, :, :, :-1] - f[:, :, :, 1:])               # (2,P,H,W-1)
    gy_sum = jnp.sum(gy_f.astype(jnp.float32), axis=0)
    out_y_ref[...] += jnp.sum(gy_sum * wy, axis=0)[None, None]


def _vmem_budget():
    """Generation-aware (limit, per-block budget) in bytes."""
    try:
        cap = int(pltpu.get_tpu_info().vmem_capacity_bytes)
    except Exception:
        cap = 64 * 1024 * 1024          # conservative fallback (v7x-sized)
    limit = (cap * 3) // 4              # ~96 MiB v5e/v6e, ~48 MiB v7x
    budget = limit // 2                 # headroom for pipeline buffers + scratch
    return limit, budget


def _pick_plane_block(T, Ci, H, W, itemsize, budget_bytes):
    """Largest divisor of T such that double-buffered inputs plus in-kernel
    f32 intermediates (x/y paths sequenced) stay within the VMEM budget."""
    per_plane_in = (2 + Ci) * H * W * itemsize       # only 2 flow channels DMA'd
    per_plane_tmp = (2 * Ci + 8) * H * W * 4         # peak f32 temps, x/y sequenced
    per_plane = 2 * per_plane_in + per_plane_tmp     # 2x: input pipeline buffers
    p = int(max(1, min(T, budget_bytes // max(per_plane, 1))))
    while T % p != 0:
        p -= 1
    return p


def smooth_loss(flow, image):
    """flow: (B, Cf>=2, T, H, W); image: (B, Ci, T, H, W). Returns scalar loss."""
    B, Cf, T, H, W = flow.shape
    Bi, Ci, Ti, Hi, Wi = image.shape
    assert (B, T, H, W) == (Bi, Ti, Hi, Wi), "flow/image shape mismatch"
    assert Cf >= 2, "flow needs at least 2 channels"
    assert H >= 2 and W >= 2, "spatial dims must be >= 2"

    vmem_limit, block_budget = _vmem_budget()
    P = _pick_plane_block(T, Ci, H, W, jnp.dtype(flow.dtype).itemsize, block_budget)
    n_t = T // P

    # v7x megacore: if the batch axis can't feed both TensorCores, split the
    # time-block axis into two "parallel" halves with independent accumulators.
    S = 1
    if B < 2:
        if n_t % 2 == 1 and P % 2 == 0:
            P //= 2
            n_t = T // P
        if n_t >= 2 and n_t % 2 == 0:
            S = 2
    n_half = n_t // S

    out_x, out_y = pl.pallas_call(
        _smooth_loss_kernel,
        out_shape=(
            jax.ShapeDtypeStruct((B, S, H - 1, W), jnp.float32),
            jax.ShapeDtypeStruct((B, S, H, W - 1), jnp.float32),
        ),
        grid_spec=pltpu.PrefetchScalarGridSpec(
            num_scalar_prefetch=0,
            grid=(B, S, n_half),
            in_specs=[
                # Only the first 2 flow channels are DMA'd (block of 2, index 0).
                pl.BlockSpec((1, 2, P, H, W),
                             lambda b, s, t, n_half=n_half: (b, 0, s * n_half + t, 0, 0)),
                pl.BlockSpec((1, Ci, P, H, W),
                             lambda b, s, t, n_half=n_half: (b, 0, s * n_half + t, 0, 0)),
            ],
            out_specs=[
                pl.BlockSpec((1, 1, H - 1, W), lambda b, s, t: (b, s, 0, 0)),
                pl.BlockSpec((1, 1, H, W - 1), lambda b, s, t: (b, s, 0, 0)),
            ],
        ),
        compiler_params=pltpu.CompilerParams(
            dimension_semantics=("parallel", "parallel", "arbitrary"),
            vmem_limit_bytes=int(vmem_limit),
        ),
    )(flow, image)

    n_planes = B * T  # size of the folded batch after cat(unbind(., 2), 0)
    loss_x = jnp.sum(out_x) / jnp.float32(n_planes * (H - 1) * W)
    loss_y = jnp.sum(out_y) / jnp.float32(n_planes * H * (W - 1))
    return (loss_x + loss_y) * 0.5


def _smooth_loss_reference(flow, image):
    """Pure-JAX transliteration of the PyTorch module, for verification."""
    B, Cf, T, H, W = flow.shape
    Ci = image.shape[1]
    f = jnp.transpose(flow, (2, 0, 1, 3, 4)).reshape(T * B, Cf, H, W)
    im = jnp.transpose(image, (2, 0, 1, 3, 4)).reshape(T * B, Ci, H, W)

    gx = lambda a: a[:, :, :-1, :] - a[:, :, 1:, :]
    gy = lambda a: a[:, :, :, :-1] - a[:, :, :, 1:]
    wx = jnp.exp(-jnp.mean(jnp.abs(gx(im)), axis=1, keepdims=True))
    wy = jnp.exp(-jnp.mean(jnp.abs(gy(im)), axis=1, keepdims=True))

    total = 0.0
    for i in range(2):
        fx = f[:, i:i + 1]
        total = total + jnp.mean(jnp.abs(gx(fx) * wx)) \
                      + jnp.mean(jnp.abs(gy(fx) * wy))
    return total / 2.0


if __name__ == "__main__":
    # Small deterministic inputs consistent with the module:
    # flow (B, 2, T, H, W), image (B, 3, T, H, W).
    B, Cf, Ci, T, H, W = 2, 2, 3, 4, 16, 16
    key = jax.random.PRNGKey(0)
    kf, ki = jax.random.split(key)
    flow = jax.random.normal(kf, (B, Cf, T, H, W), dtype=jnp.float32)
    image = jax.random.normal(ki, (B, Ci, T, H, W), dtype=jnp.float32)

    loss = jax.jit(smooth_loss)(flow, image)
    jax.block_until_ready(loss)

    ref = _smooth_loss_reference(flow, image)
    assert loss.shape == () and bool(jnp.isfinite(loss))
    assert abs(float(loss) - float(ref)) <= 1e-4 * max(1.0, abs(float(ref))), \
        (float(loss), float(ref))
    print("KERNEL_OK")
</pallas_src>

<mosaic_0001>
module attributes {stable_mosaic.version = 11 : i64} {
  func.func @_smooth_loss_kernel(%arg0: i32, %arg1: i32, %arg2: i32, %arg3: memref<1x2x4x16x16xf32, #tpu.memory_space<vmem>>, %arg4: memref<1x3x4x16x16xf32, #tpu.memory_space<vmem>>, %arg5: memref<1x1x15x16xf32, #tpu.memory_space<vmem>>, %arg6: memref<1x1x16x15xf32, #tpu.memory_space<vmem>>) attributes {dimension_semantics = [#tpu.dimension_semantics<parallel>, #tpu.dimension_semantics<parallel>, #tpu.dimension_semantics<arbitrary>], iteration_bounds = array<i64: 2, 1, 1>, scalar_prefetch = 0 : i64, scratch_operands = 0 : i64, tpu.core_type = #tpu.core_type<tc>, window_params = [{transform_indices = @transform_0, window_bounds = array<i64: 1, 2, 4, 16, 16>}, {transform_indices = @transform_1, window_bounds = array<i64: 1, 3, 4, 16, 16>}, {transform_indices = @transform_2, window_bounds = array<i64: 1, 1, 15, 16>}, {transform_indices = @transform_3, window_bounds = array<i64: 1, 1, 16, 15>}]} {
    %c0_i32 = arith.constant 0 : i32
    %0 = arith.cmpi eq, %arg2, %c0_i32 : i32
    %1 = arith.extui %0 : i1 to i32
    %c0_i32_0 = arith.constant 0 : i32
    %2 = arith.cmpi ne, %1, %c0_i32_0 : i32
    scf.if %2 {
      %cst_35 = arith.constant 0.000000e+00 : f32
      %49 = vector.broadcast %cst_35 : f32 to vector<1x1x15x16xf32>
      %c0_36 = arith.constant 0 : index
      %c0_37 = arith.constant 0 : index
      %c0_38 = arith.constant 0 : index
      %c0_39 = arith.constant 0 : index
      %50 = vector.load %arg5[%c0_36, %c0_37, %c0_38, %c0_39] : memref<1x1x15x16xf32, #tpu.memory_space<vmem>>, vector<1x1x15x16xf32>
      tpu.vector_store %arg5[%c0_36, %c0_37, %c0_38, %c0_39], %49 {strides = array<i32>} : memref<1x1x15x16xf32, #tpu.memory_space<vmem>>, vector<1x1x15x16xf32>,
      %cst_40 = arith.constant 0.000000e+00 : f32
      %51 = vector.broadcast %cst_40 : f32 to vector<1x1x16x15xf32>
      %c0_41 = arith.constant 0 : index
      %c0_42 = arith.constant 0 : index
      %c0_43 = arith.constant 0 : index
      %c0_44 = arith.constant 0 : index
      %52 = vector.load %arg6[%c0_41, %c0_42, %c0_43, %c0_44] : memref<1x1x16x15xf32, #tpu.memory_space<vmem>>, vector<1x1x16x15xf32>
      tpu.vector_store %arg6[%c0_41, %c0_42, %c0_43, %c0_44], %51 {strides = array<i32>} : memref<1x1x16x15xf32, #tpu.memory_space<vmem>>, vector<1x1x16x15xf32>,
    } else {
    }
    %c0 = arith.constant 0 : index
    %c0_1 = arith.constant 0 : index
    %c0_2 = arith.constant 0 : index
    %c0_3 = arith.constant 0 : index
    %c0_4 = arith.constant 0 : index
    %3 = vector.load %arg3[%c0, %c0_1, %c0_2, %c0_3, %c0_4] : memref<1x2x4x16x16xf32, #tpu.memory_space<vmem>>, vector<1x2x4x16x16xf32>
    %4 = vector.shape_cast %3 : vector<1x2x4x16x16xf32> to vector<2x4x16x16xf32>
    %c0_5 = arith.constant 0 : index
    %c0_6 = arith.constant 0 : index
    %c0_7 = arith.constant 0 : index
    %c0_8 = arith.constant 0 : index
    %c0_9 = arith.constant 0 : index
    %5 = vector.load %arg4[%c0_5, %c0_6, %c0_7, %c0_8, %c0_9] : memref<1x3x4x16x16xf32, #tpu.memory_space<vmem>>, vector<1x3x4x16x16xf32>
    %6 = vector.shape_cast %5 : vector<1x3x4x16x16xf32> to vector<3x4x16x16xf32>
    %7 = vector.extract_strided_slice %6 {offsets = [0, 0, 0, 0], sizes = [3, 4, 15, 16], strides = [1, 1, 1, 1]} : vector<3x4x16x16xf32> to vector<3x4x15x16xf32>
    %8 = vector.extract_strided_slice %6 {offsets = [0, 0, 1, 0], sizes = [3, 4, 15, 16], strides = [1, 1, 1, 1]} : vector<3x4x16x16xf32> to vector<3x4x15x16xf32>
    %9 = arith.subf %7, %8 : vector<3x4x15x16xf32>
    %10 = math.absf %9 : vector<3x4x15x16xf32>
    %cst = arith.constant dense<0.000000e+00> : vector<4x15x16xf32>
    %11 = vector.multi_reduction <add>, %10, %cst [0] : vector<3x4x15x16xf32> to vector<4x15x16xf32>
    %cst_10 = arith.constant 3.000000e+00 : f32
    %12 = vector.broadcast %cst_10 : f32 to vector<4x15x16xf32>
    %13 = arith.divf %11, %12 : vector<4x15x16xf32>
    %cst_11 = arith.constant 0.000000e+00 : f32
    %14 = vector.broadcast %cst_11 : f32 to vector<4x15x16xf32>
    %15 = arith.subf %14, %13 : vector<4x15x16xf32>
    %16 = math.exp %15 : vector<4x15x16xf32>
    %17 = vector.extract_strided_slice %4 {offsets = [0, 0, 0, 0], sizes = [2, 4, 15, 16], strides = [1, 1, 1, 1]} : vector<2x4x16x16xf32> to vector<2x4x15x16xf32>
    %18 = vector.extract_strided_slice %4 {offsets = [0, 0, 1, 0], sizes = [2, 4, 15, 16], strides = [1, 1, 1, 1]} : vector<2x4x16x16xf32> to vector<2x4x15x16xf32>
    %19 = arith.subf %17, %18 : vector<2x4x15x16xf32>
    %20 = math.absf %19 : vector<2x4x15x16xf32>
    %cst_12 = arith.constant dense<0.000000e+00> : vector<4x15x16xf32>
    %21 = vector.multi_reduction <add>, %20, %cst_12 [0] : vector<2x4x15x16xf32> to vector<4x15x16xf32>
    %c0_13 = arith.constant 0 : index
    %c0_14 = arith.constant 0 : index
    %c0_15 = arith.constant 0 : index
    %c0_16 = arith.constant 0 : index
    %22 = vector.load %arg5[%c0_13, %c0_14, %c0_15, %c0_16] : memref<1x1x15x16xf32, #tpu.memory_space<vmem>>, vector<1x1x15x16xf32>
    %23 = arith.mulf %21, %16 : vector<4x15x16xf32>
    %cst_17 = arith.constant dense<0.000000e+00> : vector<15x16xf32>
    %24 = vector.multi_reduction <add>, %23, %cst_17 [0] : vector<4x15x16xf32> to vector<15x16xf32>
    %25 = vector.shape_cast %24 : vector<15x16xf32> to vector<1x1x15x16xf32>
    %26 = arith.addf %22, %25 : vector<1x1x15x16xf32>
    %c0_18 = arith.constant 0 : index
    %c0_19 = arith.constant 0 : index
    %c0_20 = arith.constant 0 : index
    %c0_21 = arith.constant 0 : index
    %27 = vector.load %arg5[%c0_18, %c0_19, %c0_20, %c0_21] : memref<1x1x15x16xf32, #tpu.memory_space<vmem>>, vector<1x1x15x16xf32>
    tpu.vector_store %arg5[%c0_18, %c0_19, %c0_20, %c0_21], %26 {strides = array<i32>} : memref<1x1x15x16xf32, #tpu.memory_space<vmem>>, vector<1x1x15x16xf32>,
    %28 = vector.extract_strided_slice %6 {offsets = [0, 0, 0, 0], sizes = [3, 4, 16, 15], strides = [1, 1, 1, 1]} : vector<3x4x16x16xf32> to vector<3x4x16x15xf32>
    %29 = vector.extract_strided_slice %6 {offsets = [0, 0, 0, 1], sizes = [3, 4, 16, 15], strides = [1, 1, 1, 1]} : vector<3x4x16x16xf32> to vector<3x4x16x15xf32>
    %30 = arith.subf %28, %29 : vector<3x4x16x15xf32>
    %31 = math.absf %30 : vector<3x4x16x15xf32>
    %cst_22 = arith.constant dense<0.000000e+00> : vector<4x16x15xf32>
    %32 = vector.multi_reduction <add>, %31, %cst_22 [0] : vector<3x4x16x15xf32> to vector<4x16x15xf32>
    %cst_23 = arith.constant 3.000000e+00 : f32
    %33 = vector.broadcast %cst_23 : f32 to vector<4x16x15xf32>
    %34 = arith.divf %32, %33 : vector<4x16x15xf32>
    %cst_24 = arith.constant 0.000000e+00 : f32
    %35 = vector.broadcast %cst_24 : f32 to vector<4x16x15xf32>
    %36 = arith.subf %35, %34 : vector<4x16x15xf32>
    %37 = math.exp %36 : vector<4x16x15xf32>
    %38 = vector.extract_strided_slice %4 {offsets = [0, 0, 0, 0], sizes = [2, 4, 16, 15], strides = [1, 1, 1, 1]} : vector<2x4x16x16xf32> to vector<2x4x16x15xf32>
    %39 = vector.extract_strided_slice %4 {offsets = [0, 0, 0, 1], sizes = [2, 4, 16, 15], strides = [1, 1, 1, 1]} : vector<2x4x16x16xf32> to vector<2x4x16x15xf32>
    %40 = arith.subf %38, %39 : vector<2x4x16x15xf32>
    %41 = math.absf %40 : vector<2x4x16x15xf32>
    %cst_25 = arith.constant dense<0.000000e+00> : vector<4x16x15xf32>
    %42 = vector.multi_reduction <add>, %41, %cst_25 [0] : vector<2x4x16x15xf32> to vector<4x16x15xf32>
    %c0_26 = arith.constant 0 : index
    %c0_27 = arith.constant 0 : index
    %c0_28 = arith.constant 0 : index
    %c0_29 = arith.constant 0 : index
    %43 = vector.load %arg6[%c0_26, %c0_27, %c0_28, %c0_29] : memref<1x1x16x15xf32, #tpu.memory_space<vmem>>, vector<1x1x16x15xf32>
    %44 = arith.mulf %42, %37 : vector<4x16x15xf32>
    %cst_30 = arith.constant dense<0.000000e+00> : vector<16x15xf32>
    %45 = vector.multi_reduction <add>, %44, %cst_30 [0] : vector<4x16x15xf32> to vector<16x15xf32>
    %46 = vector.shape_cast %45 : vector<16x15xf32> to vector<1x1x16x15xf32>
    %47 = arith.addf %43, %46 : vector<1x1x16x15xf32>
    %c0_31 = arith.constant 0 : index
    %c0_32 = arith.constant 0 : index
    %c0_33 = arith.constant 0 : index
    %c0_34 = arith.constant 0 : index
    %48 = vector.load %arg6[%c0_31, %c0_32, %c0_33, %c0_34] : memref<1x1x16x15xf32, #tpu.memory_space<vmem>>, vector<1x1x16x15xf32>
    tpu.vector_store %arg6[%c0_31, %c0_32, %c0_33, %c0_34], %47 {strides = array<i32>} : memref<1x1x16x15xf32, #tpu.memory_space<vmem>>, vector<1x1x16x15xf32>,
    return
  }
  func.func @transform_0(%arg0: i32, %arg1: i32, %arg2: i32) -> (i32, i32, i32, i32, i32) {
    %c1_i32 = arith.constant 1 : i32
    %0 = arith.muli %arg1, %c1_i32 : i32
    %1 = arith.addi %0, %arg2 : i32
    %c0_i32 = arith.constant 0 : i32
    %c0_i32_0 = arith.constant 0 : i32
    %c0_i32_1 = arith.constant 0 : i32
    %c0_i32_2 = arith.constant 0 : i32
    return %arg0, %c0_i32, %1, %c0_i32_0, %c0_i32_1 : i32, i32, i32, i32, i32
  }
  func.func @transform_1(%arg0: i32, %arg1: i32, %arg2: i32) -> (i32, i32, i32, i32, i32) {
    %c1_i32 = arith.constant 1 : i32
    %0 = arith.muli %arg1, %c1_i32 : i32
    %1 = arith.addi %0, %arg2 : i32
    %c0_i32 = arith.constant 0 : i32
    %c0_i32_0 = arith.constant 0 : i32
    %c0_i32_1 = arith.constant 0 : i32
    %c0_i32_2 = arith.constant 0 : i32
    return %arg0, %c0_i32, %1, %c0_i32_0, %c0_i32_1 : i32, i32, i32, i32, i32
  }
  func.func @transform_2(%arg0: i32, %arg1: i32, %arg2: i32) -> (i32, i32, i32, i32) {
    %c0_i32 = arith.constant 0 : i32
    %c0_i32_0 = arith.constant 0 : i32
    %c0_i32_1 = arith.constant 0 : i32
    return %arg0, %arg1, %c0_i32, %c0_i32_0 : i32, i32, i32, i32
  }
  func.func @transform_3(%arg0: i32, %arg1: i32, %arg2: i32) -> (i32, i32, i32, i32) {
    %c0_i32 = arith.constant 0 : i32
    %c0_i32_0 = arith.constant 0 : i32
    %c0_i32_1 = arith.constant 0 : i32
    return %arg0, %arg1, %c0_i32, %c0_i32_0 : i32, i32, i32, i32
  }
}

</mosaic_0001>

<llo_original>
// kernel: smooth_loss.1
$region0: #{smooth_loss.1}
  #allocation0 [shape = 'u32[]', space=smem, size = 0x4, offset = 0x4, fixed_abs, tag = 'smem constant byte address 0x4 - core index']
  #allocation1 [shape = 'u32[72,128]{1,0:T(1,128)}', space=vmem, size = 0x9000, scoped, tag = 'internal scratch']
  %s0 = inlined_call_operand.hbm [shape: f32[2,2,4,16,16], index: 0, kind: input, shape index: {}]
  %s1 = inlined_call_operand.hbm [shape: f32[2,3,4,16,16], index: 1, kind: input, shape index: {}]
  %s2 = inlined_call_operand.vmem [shape: f32[2,1,15,16], index: 2, kind: output, shape index: {0}]
  %s3 = inlined_call_operand.vmem [shape: f32[2,1,16,15], index: 3, kind: output, shape index: {1}]
  %4 = xla_tuple %s2, %s3
  %s5 = sld [smem:[#allocation0]]
  $region61: #{smooth_loss.1} parent=0
    _
  %s7 = ssub.s32 1, %s5
  %s8 = scalar_select 0, %s7, %s5
  $region1: #{smooth_loss.1} parent=0
    #allocation2 [shape = 'u8[131072]{0}', space=vmem, size = 0x20000, scoped, tag = 'input window, operand 0']
    #allocation3 [shape = 's32[2]{0}', space=sflag, size = 0x8, scoped, tag = 'scoped memory for smooth_loss.1']
    #allocation4 [shape = 'u8[196608]{0}', space=vmem, size = 0x30000, scoped, tag = 'input window, operand 1']
    #allocation5 [shape = 's32[2]{0}', space=sflag, size = 0x8, scoped, tag = 'scoped memory for smooth_loss.1']
    %9 = vsyncpa [#allocation3], 0
    %s10 = scalar_lea.sflag [#allocation3], 1
    %11 = vsyncpa %s10, 0
    %12 = vsyncpa [#allocation5], 0
    %s13 = scalar_lea.sflag [#allocation5], 1
    %14 = vsyncpa %s13, 0
    loop: start=0, step=1, limit=4
    $region2: #{smooth_loss.1} parent=1 // loop_pre_header
      _
    $region3: #{smooth_loss.1} parent=1 // loop_header
      %s16 = sphi 0, %s20
      %p17 = scmp.ge.s32.totalorder %s16, 4
      %s23 = sphi 0, %s42
      %s24 = sphi 0, %s38
      %s25 = sphi 0, %s34
      %s26 = sphi 0, %s23
      %s27 = sphi 0, %s24
      %s28 = sphi 0, %s25
      %s29 = sphi 0, %s26
      %s30 = sphi 0, %s27
      %s31 = sphi 0, %s28
      %s49 = sphi 0, %s51
      %s52 = sphi 0, %s49
      %s53 = sphi 0, %s52
      %s69 = sphi 0, %s53
      %s79 = sphi 0, %s81
      %s82 = sphi 0, %s79
      %s83 = sphi 0, %s82
      %s99 = sphi 0, %s83
      %s107 = sphi 0, %s109
      %s110 = sphi 0, %s107
      %s111 = sphi 0, %s110
      %s127 = sphi 0, %s111
      %s135 = sphi 0, %s137
      %s138 = sphi 0, %s135
      %s139 = sphi 0, %s138
      %s155 = sphi 0, %s139
    $region4: #{smooth_loss.1} parent=1 // loop_header_branch
      %19 = sbr.rel (%p17) target = $region8
    $region5: #{smooth_loss.1} parent=1 // loop_body
      %s21 = ssub.s32 %s16, 1
      %s22 = ssub.s32 %s16, 2
      %s32 = sadd.s32 1, %s25
      %p33 = scmp.ge.s32.totalorder %s32, 1
      %s34 = scalar_select %p33, 0, %s32
      %s35 = sadd.s32 1, %s24
      %s36 = scalar_select %p33, %s35, %s24
      %p37 = scmp.ge.s32.totalorder %s36, 1
      %s38 = scalar_select %p37, 0, %s36
      %s39 = sadd.s32 1, %s23
      %s40 = scalar_select %p37, %s39, %s23
      %p41 = scmp.ge.s32.totalorder %s40, 2
      %s42 = scalar_select %p41, 0, %s40
      %s43 = sadd.s32 %s24, %s25
      %s44 = sadd.s32 %s38, %s34
      %s45 = ssub.s32 %s23, %s42
      %s46 = ssub.s32 %s43, %s44
      %s47 = sor.u32 %s45, %s46
      %p48 = scmp.eq.s32.totalorder %s47, 0
      %s50 = sadd.s32 %s49, 1
      %s51 = scalar_select %p48, %s49, %s50
      %p54 = pneg %p48
      %p55 = scmp.eq.s32.totalorder %s16, 1
      %p56 = por %p54, %p55
      %p57 = scmp.ne.s32.totalorder %s49, %s52
      %p58 = scmp.eq.s32.totalorder %s16, 0
      %p59 = por %p57, %p58
      %p60 = scmp.ne.s32.totalorder %s49, %s52
      %p61 = scmp.eq.s32.totalorder %s21, 1
      %p62 = por %p60, %p61
      %p63 = scmp.ne.s32.totalorder %s52, %s53
      %p64 = scmp.eq.s32.totalorder %s21, 0
      %p65 = por %p63, %p64
      %p66 = scmp.ne.s32.totalorder %s52, %s53
      %p67 = scmp.eq.s32.totalorder %s22, 1
      %p68 = por %p66, %p67
      %p70 = scmp.ne.s32.totalorder %s53, %s69
      %p71 = scmp.eq.s32.totalorder %s22, 0
      %p72 = por %p70, %p71
      %s73 = sadd.s32 %s24, %s25
      %s74 = sadd.s32 %s38, %s34
      %s75 = ssub.s32 %s23, %s42
      %s76 = ssub.s32 %s73, %s74
      %s77 = sor.u32 %s75, %s76
      %p78 = scmp.eq.s32.totalorder %s77, 0
      %s80 = sadd.s32 %s79, 1
      %s81 = scalar_select %p78, %s79, %s80
      %p84 = pneg %p78
      %p85 = scmp.eq.s32.totalorder %s16, 1
      %p86 = por %p84, %p85
      %p87 = scmp.ne.s32.totalorder %s79, %s82
      %p88 = scmp.eq.s32.totalorder %s16, 0
      %p89 = por %p87, %p88
      %p90 = scmp.ne.s32.totalorder %s79, %s82
      %p91 = scmp.eq.s32.totalorder %s21, 1
      %p92 = por %p90, %p91
      %p93 = scmp.ne.s32.totalorder %s82, %s83
      %p94 = scmp.eq.s32.totalorder %s21, 0
      %p95 = por %p93, %p94
      %p96 = scmp.ne.s32.totalorder %s82, %s83
      %p97 = scmp.eq.s32.totalorder %s22, 1
      %p98 = por %p96, %p97
      %p100 = scmp.ne.s32.totalorder %s83, %s99
      %p101 = scmp.eq.s32.totalorder %s22, 0
      %p102 = por %p100, %p101
      %s103 = ssub.s32 %s23, %s42
      %s104 = ssub.s32 %s24, %s38
      %s105 = sor.u32 %s103, %s104
      %p106 = scmp.eq.s32.totalorder %s105, 0
      %s108 = sadd.s32 %s107, 1
      %s109 = scalar_select %p106, %s107, %s108
      %p112 = pneg %p106
      %p113 = scmp.eq.s32.totalorder %s16, 1
      %p114 = por %p112, %p113
      %p115 = scmp.ne.s32.totalorder %s107, %s110
      %p116 = scmp.eq.s32.totalorder %s16, 0
      %p117 = por %p115, %p116
      %p118 = scmp.ne.s32.totalorder %s107, %s110
      %p119 = scmp.eq.s32.totalorder %s21, 1
      %p120 = por %p118, %p119
      %p121 = scmp.ne.s32.totalorder %s110, %s111
      %p122 = scmp.eq.s32.totalorder %s21, 0
      %p123 = por %p121, %p122
      %p124 = scmp.ne.s32.totalorder %s110, %s111
      %p125 = scmp.eq.s32.totalorder %s22, 1
      %p126 = por %p124, %p125
      %p128 = scmp.ne.s32.totalorder %s111, %s127
      %p129 = scmp.eq.s32.totalorder %s22, 0
      %p130 = por %p128, %p129
      %s131 = ssub.s32 %s23, %s42
      %s132 = ssub.s32 %s24, %s38
      %s133 = sor.u32 %s131, %s132
      %p134 = scmp.eq.s32.totalorder %s133, 0
      %s136 = sadd.s32 %s135, 1
      %s137 = scalar_select %p134, %s135, %s136
      %p140 = pneg %p134
      %p141 = scmp.eq.s32.totalorder %s16, 1
      %p142 = por %p140, %p141
      %p143 = scmp.ne.s32.totalorder %s135, %s138
      %p144 = scmp.eq.s32.totalorder %s16, 0
      %p145 = por %p143, %p144
      %p146 = scmp.ne.s32.totalorder %s135, %s138
      %p147 = scmp.eq.s32.totalorder %s21, 1
      %p148 = por %p146, %p147
      %p149 = scmp.ne.s32.totalorder %s138, %s139
      %p150 = scmp.eq.s32.totalorder %s21, 0
      %p151 = por %p149, %p150
      %p152 = scmp.ne.s32.totalorder %s138, %s139
      %p153 = scmp.eq.s32.totalorder %s22, 1
      %p154 = por %p152, %p153
      %p156 = scmp.ne.s32.totalorder %s139, %s155
      %p157 = scmp.eq.s32.totalorder %s22, 0
      %p158 = por %p156, %p157
      %p159 = scmp.le.s32.totalorder 1, %s16
      %p160 = scmp.lt.s32.totalorder %s16, 3
      %p161 = pnand %p159, %p160
      %p162 = pneg %p161
      // Predicated region
      $region9: #{smooth_loss.1} parent=5 // pred_check
        _
      $region10: #{smooth_loss.1} parent=5 // pred_check_branch
        %164 = sbr.rel (%p161) target = $region12
      $region11: #{smooth_loss.1} parent=5 // pred_region
        %s165 = ssub.s32 %s16, 1
      $region12: #{smooth_loss.1} parent=5 // pred_fallthru
        _
      %p166 = scmp.lt.s32.totalorder %s16, 2
      // Predicated region
      $region13: #{smooth_loss.1} parent=5 // pred_check
        %p167 = pneg %p166
      $region14: #{smooth_loss.1} parent=5 // pred_check_branch
        %169 = sbr.rel (%p167) target = $region16
      $region15: #{smooth_loss.1} parent=5 // pred_region
        // Predicated region
        $region17: #{smooth_loss.1} parent=15 // pred_check
          %p170 = pneg %p59
        $region18: #{smooth_loss.1} parent=15 // pred_check_branch
          %172 = sbr.rel (%p170) target = $region20
        $region19: #{smooth_loss.1} parent=15 // pred_region
          %s173 = sand.u32 %s49, 1
          %s174 = scalar_lea.sflag [#allocation3], %s173
          %s175 = sand.u32 %s49, 1
          %s176 = smul.addr %s175, 128
          %s177 = scalar_lea.vmem [#allocation2], %s176
          %s178 = sadd.s32 %s24, %s25
          %s179 = smul.u32 4, %s178
          %181 = vsyncadd %s174, 0
          %s182 = smul.addr %s179, 2
          %s183 = smul.addr %s23, 16
          %s184 = sadd.s32 %s182, %s183
          %s185 = smul.addr %s184, 8
          %s186 = scalar_lea.hbm %s0, %s185
          %s187 = sshll.u32 %s186, 4
          %s188 = int_to_ptr.hbm [resolvable:$true] %s187
          %s189 = sshll.u32 %s177, 4
          %s190 = int_to_ptr.vmem [resolvable:$true] %s189
          %195 = dma.hbm_to_vmem [thread:$0]  %s188, 2048, %s190, %s174, 128, 128, 8
        $region20: #{smooth_loss.1} parent=15 // pred_fallthru
          _
        // Predicated region
        $region21: #{smooth_loss.1} parent=15 // pred_check
          %p196 = pneg %p89
        $region22: #{smooth_loss.1} parent=15 // pred_check_branch
          %198 = sbr.rel (%p196) target = $region24
        $region23: #{smooth_loss.1} parent=15 // pred_region
          %s199 = sand.u32 %s79, 1
          %s200 = scalar_lea.sflag [#allocation5], %s199
          %s201 = sand.u32 %s79, 1
          %s202 = smul.addr %s201, 192
          %s203 = scalar_lea.vmem [#allocation4], %s202
          %s204 = sadd.s32 %s24, %s25
          %s205 = smul.u32 4, %s204
          %207 = vsyncadd %s200, 0
          %s208 = smul.addr %s205, 2
          %s209 = smul.addr %s23, 24
          %s210 = sadd.s32 %s208, %s209
          %s211 = smul.addr %s210, 8
          %s212 = scalar_lea.hbm %s1, %s211
          %s213 = sshll.u32 %s212, 4
          %s214 = int_to_ptr.hbm [resolvable:$true] %s213
          %s215 = sshll.u32 %s203, 4
          %s216 = int_to_ptr.vmem [resolvable:$true] %s215
          %221 = dma.hbm_to_vmem [thread:$0]  %s214, 3072, %s216, %s200, 128, 128, 8
        $region24: #{smooth_loss.1} parent=15 // pred_fallthru
          _
      $region16: #{smooth_loss.1} parent=5 // pred_fallthru
        _
      %p222 = scmp.le.s32.totalorder 1, %s16
      %p223 = scmp.lt.s32.totalorder %s16, 3
      %p224 = pnand %p222, %p223
      %p225 = pneg %p224
      // Predicated region
      $region25: #{smooth_loss.1} parent=5 // pred_check
        _
      $region26: #{smooth_loss.1} parent=5 // pred_check_branch
        %227 = sbr.rel (%p224) target = $region28
      $region27: #{smooth_loss.1} parent=5 // pred_region
        %s228 = ssub.s32 %s16, 1
        %s229 = sand.u32 %s52, 1
        %s230 = scalar_lea.sflag [#allocation3], %s229
        %s231 = sand.u32 %s52, 1
        %s232 = smul.addr %s231, 128
        %s233 = scalar_lea.vmem [#allocation2], %s232
        // Predicated region
        $region29: #{smooth_loss.1} parent=27 // pred_check
          %p234 = pneg %p65
        $region30: #{smooth_loss.1} parent=27 // pred_check_branch
          %236 = sbr.rel (%p234) target = $region32
        $region31: #{smooth_loss.1} parent=27 // pred_region
          %238 = dma.done %s230, 2048
        $region32: #{smooth_loss.1} parent=27 // pred_fallthru
          _
        %s239 = sand.u32 %s82, 1
        %s240 = scalar_lea.sflag [#allocation5], %s239
        %s241 = sand.u32 %s82, 1
        %s242 = smul.addr %s241, 192
        %s243 = scalar_lea.vmem [#allocation4], %s242
        // Predicated region
        $region33: #{smooth_loss.1} parent=27 // pred_check
          %p244 = pneg %p95
        $region34: #{smooth_loss.1} parent=27 // pred_check_branch
          %246 = sbr.rel (%p244) target = $region36
        $region35: #{smooth_loss.1} parent=27 // pred_region
          %248 = dma.done %s240, 3072
        $region36: #{smooth_loss.1} parent=27 // pred_fallthru
          _
        %s249 = sand.u32 %s52, 1
        %s250 = scalar_lea.sflag [#allocation3], %s249
        %s251 = sand.u32 %s52, 1
        %s252 = smul.addr %s251, 128
        %s253 = scalar_lea.vmem [#allocation2], %s252
        %p254 = pneg %p65
        %p255 = pneg %p62
        %s256 = sand.u32 %s82, 1
        %s257 = scalar_lea.sflag [#allocation5], %s256
        %s258 = sand.u32 %s82, 1
        %s259 = smul.addr %s258, 192
        %s260 = scalar_lea.vmem [#allocation4], %s259
        %p261 = pneg %p95
        %p262 = pneg %p92
        %p263 = pneg %p123
        %p264 = pneg %p120
        %p265 = scmp.lt.s32.totalorder %s26, 1
        %s266 = scalar_select %p265, %s26, 1
        %p267 = scmp.lt.s32.totalorder %s27, 0
        %s268 = scalar_select %p267, %s27, 0
        %s269 = smul.addr %s268, 2
        %s270 = smul.addr %s266, 2
        %s271 = sadd.s32 %s269, %s270
        %s272 = smul.addr %s271, 8
        %s273 = scalar_lea.vmem %s2, %s272
        %p274 = pneg %p151
        %p275 = pneg %p148
        %p276 = scmp.lt.s32.totalorder %s26, 1
        %s277 = scalar_select %p276, %s26, 1
        %p278 = scmp.lt.s32.totalorder %s27, 0
        %s279 = scalar_select %p278, %s27, 0
        %s280 = smul.addr %s279, 2
        %s281 = smul.addr %s277, 2
        %s282 = sadd.s32 %s280, %s281
        %s283 = smul.addr %s282, 8
        %s284 = scalar_lea.vmem %s3, %s283
        %s285 = sadd.s32 %s27, %s28
        %s286 = smul.u32 4, %s285
        %s287 = sadd.s32 %s27, %s28
        %s288 = smul.u32 4, %s287
        %p289 = scmp.lt.s32.totalorder %s26, 1
        %s290 = scalar_select %p289, %s26, 1
        %p291 = scmp.lt.s32.totalorder %s27, 0
        %s292 = scalar_select %p291, %s27, 0
        %s293 = smul.addr %s292, 2
        %s294 = smul.addr %s290, 2
        %s295 = sadd.s32 %s293, %s294
        %s296 = smul.addr %s295, 8
        %s297 = scalar_lea.vmem %s2, %s296
        %p298 = scmp.lt.s32.totalorder %s26, 1
        %s299 = scalar_select %p298, %s26, 1
        %p300 = scmp.lt.s32.totalorder %s27, 0
        %s301 = scalar_select %p300, %s27, 0
        %s302 = smul.addr %s301, 2
        %s303 = smul.addr %s299, 2
        %s304 = sadd.s32 %s302, %s303
        %s305 = smul.addr %s304, 8
        %s306 = scalar_lea.vmem %s3, %s305
        %p307 = scmp.eq.s32.totalorder %s28, 0
        // Predicated region
        $region37: #{smooth_loss.1} parent=27 // pred_check
          %p308 = pneg %p307
        $region38: #{smooth_loss.1} parent=27 // pred_check_branch
          %310 = sbr.rel (%p308) target = $region40
        $region39: #{smooth_loss.1} parent=27 // pred_region
          %vm311 = vcmask 130048
          %312 = vst.msk [vmem:[%s297] sm:$0xff] %vm311, 0.0
          %vm313 = vcmask 129024
          %314 = vst.msk [vmem:[%s297 + $0x8] sm:$0x7f] %vm313, 0.0
          %vm315 = vcmask 121856
          %316 = vst.msk [vmem:[%s306] sm:$0xff] %vm315, 0.0
          %317 = vst.msk [vmem:[%s306 + $0x8] sm:$0xff] %vm315, 0.0
        $region40: #{smooth_loss.1} parent=27 // pred_fallthru
          _
        %v318 = vld [vmem:[%s233] sm:$0xff]
        %v319 = vld [vmem:[%s233 + $0x8] sm:$0xff]
        %v320 = vld [vmem:[%s233 + $0x10] sm:$0xff]
        %v321 = vld [vmem:[%s233 + $0x18] sm:$0xff]
        %v322 = vld [vmem:[%s233 + $0x20] sm:$0xff]
        %v323 = vld [vmem:[%s233 + $0x28] sm:$0xff]
        %v324 = vld [vmem:[%s233 + $0x30] sm:$0xff]
        %v325 = vld [vmem:[%s233 + $0x38] sm:$0xff]
        %v326 = vld [vmem:[%s233 + $0x40] sm:$0xff]
        %v327 = vld [vmem:[%s233 + $0x48] sm:$0xff]
        %v328 = vld [vmem:[%s233 + $0x50] sm:$0xff]
        %v329 = vld [vmem:[%s233 + $0x58] sm:$0xff]
        %v330 = vld [vmem:[%s233 + $0x60] sm:$0xff]
        %v331 = vld [vmem:[%s233 + $0x68] sm:$0xff]
        %v332 = vld [vmem:[%s233 + $0x70] sm:$0xff]
        %v333 = vld [vmem:[%s233 + $0x78] sm:$0xff]
        %v334 = vld [vmem:[%s243] sm:$0xff]
        %v335 = vld [vmem:[%s243 + $0x8] sm:$0xff]
        %v336 = vld [vmem:[%s243 + $0x10] sm:$0xff]
        %v337 = vld [vmem:[%s243 + $0x18] sm:$0xff]
        %v338 = vld [vmem:[%s243 + $0x20] sm:$0xff]
        %v339 = vld [vmem:[%s243 + $0x28] sm:$0xff]
        %v340 = vld [vmem:[%s243 + $0x30] sm:$0xff]
        %v341 = vld [vmem:[%s243 + $0x38] sm:$0xff]
        %v342 = vld [vmem:[%s243 + $0x40] sm:$0xff]
        %v343 = vld [vmem:[%s243 + $0x48] sm:$0xff]
        %v344 = vld [vmem:[%s243 + $0x50] sm:$0xff]
        %v345 = vld [vmem:[%s243 + $0x58] sm:$0xff]
        %v346 = vld [vmem:[%s243 + $0x60] sm:$0xff]
        %v347 = vld [vmem:[%s243 + $0x68] sm:$0xff]
        %v348 = vld [vmem:[%s243 + $0x70] sm:$0xff]
        %v349 = vld [vmem:[%s243 + $0x78] sm:$0xff]
        %v350 = vld [vmem:[%s243 + $0x80] sm:$0xff]
        %v351 = vld [vmem:[%s243 + $0x88] sm:$0xff]
        %v352 = vld [vmem:[%s243 + $0x90] sm:$0xff]
        %v353 = vld [vmem:[%s243 + $0x98] sm:$0xff]
        %v354 = vld [vmem:[%s243 + $0xa0] sm:$0xff]
        %v355 = vld [vmem:[%s243 + $0xa8] sm:$0xff]
        %v356 = vld [vmem:[%s243 + $0xb0] sm:$0xff]
        %v357 = vld [vmem:[%s243 + $0xb8] sm:$0xff]
        %vm382 = vcmask 1046528
        %v383 = vrot.slane %v334, 1
        %v384 = vrot.slane %v335, 1
        %v385 = vsel %vm382, %v383, %v384
        %v386 = vrot.slane %v336, 1
        %v387 = vrot.slane %v337, 1
        %v388 = vsel %vm382, %v386, %v387
        %v389 = vrot.slane %v338, 1
        %v390 = vrot.slane %v339, 1
        %v391 = vsel %vm382, %v389, %v390
        %v392 = vrot.slane %v340, 1
        %v393 = vrot.slane %v341, 1
        %v394 = vsel %vm382, %v392, %v393
        %v395 = vrot.slane %v342, 1
        %v396 = vrot.slane %v343, 1
        %v397 = vsel %vm382, %v395, %v396
        %v398 = vrot.slane %v344, 1
        %v399 = vrot.slane %v345, 1
        %v400 = vsel %vm382, %v398, %v399
        %v401 = vrot.slane %v346, 1
        %v402 = vrot.slane %v347, 1
        %v403 = vsel %vm382, %v401, %v402
        %v404 = vrot.slane %v348, 1
        %v405 = vrot.slane %v349, 1
        %v406 = vsel %vm382, %v404, %v405
        %v407 = vrot.slane %v350, 1
        %v408 = vrot.slane %v351, 1
        %v409 = vsel %vm382, %v407, %v408
        %v410 = vrot.slane %v352, 1
        %v411 = vrot.slane %v353, 1
        %v412 = vsel %vm382, %v410, %v411
        %v413 = vrot.slane %v354, 1
        %v414 = vrot.slane %v355, 1
        %v415 = vsel %vm382, %v413, %v414
        %v416 = vrot.slane %v356, 1
        %v417 = vrot.slane %v357, 1
        %v418 = vsel %vm382, %v416, %v417
        %v443 = vsub.f32 %v334, %v385
        %v444 = vsub.f32 %v335, %v384
        %v445 = vsub.f32 %v336, %v388
        %v446 = vsub.f32 %v337, %v387
        %v447 = vsub.f32 %v338, %v391
        %v448 = vsub.f32 %v339, %v390
        %v449 = vsub.f32 %v340, %v394
        %v450 = vsub.f32 %v341, %v393
        %v451 = vsub.f32 %v342, %v397
        %v452 = vsub.f32 %v343, %v396
        %v453 = vsub.f32 %v344, %v400
        %v454 = vsub.f32 %v345, %v399
        %v455 = vsub.f32 %v346, %v403
        %v456 = vsub.f32 %v347, %v402
        %v457 = vsub.f32 %v348, %v406
        %v458 = vsub.f32 %v349, %v405
        %v459 = vsub.f32 %v350, %v409
        %v460 = vsub.f32 %v351, %v408
        %v461 = vsub.f32 %v352, %v412
        %v462 = vsub.f32 %v353, %v411
        %v463 = vsub.f32 %v354, %v415
        %v464 = vsub.f32 %v355, %v414
        %v465 = vsub.f32 %v356, %v418
        %v466 = vsub.f32 %v357, %v417
        %v467 = vand.u32 2147483647, %v443
        %v468 = vand.u32 2147483647, %v444
        %v469 = vand.u32 2147483647, %v445
        %v470 = vand.u32 2147483647, %v446
        %v471 = vand.u32 2147483647, %v447
        %v472 = vand.u32 2147483647, %v448
        %v473 = vand.u32 2147483647, %v449
        %v474 = vand.u32 2147483647, %v450
        %v475 = vand.u32 2147483647, %v451
        %v476 = vand.u32 2147483647, %v452
        %v477 = vand.u32 2147483647, %v453
        %v478 = vand.u32 2147483647, %v454
        %v479 = vand.u32 2147483647, %v455
        %v480 = vand.u32 2147483647, %v456
        %v481 = vand.u32 2147483647, %v457
        %v482 = vand.u32 2147483647, %v458
        %v483 = vand.u32 2147483647, %v459
        %v484 = vand.u32 2147483647, %v460
        %v485 = vand.u32 2147483647, %v461
        %v486 = vand.u32 2147483647, %v462
        %v487 = vand.u32 2147483647, %v463
        %v488 = vand.u32 2147483647, %v464
        %v489 = vand.u32 2147483647, %v465
        %v490 = vand.u32 2147483647, %v466
        %vm491 = vcmask 130048
        %v492 = vsel %vm491, %v467, 0.0
        %v493 = vsel %vm491, %v475, 0.0
        %v494 = vadd.f32 %v492, %v493
        %v495 = vsel %vm491, %v483, 0.0
        %v496 = vadd.f32 %v494, %v495
        %vm497 = vcmask 129024
        %v498 = vsel %vm497, %v468, 0.0
        %v499 = vsel %vm497, %v476, 0.0
        %v500 = vadd.f32 %v498, %v499
        %v501 = vsel %vm497, %v484, 0.0
        %v502 = vadd.f32 %v500, %v501
        %v503 = vsel %vm491, %v469, 0.0
        %v504 = vsel %vm491, %v477, 0.0
        %v505 = vadd.f32 %v503, %v504
        %v506 = vsel %vm491, %v485, 0.0
        %v507 = vadd.f32 %v505, %v506
        %v508 = vsel %vm497, %v470, 0.0
        %v509 = vsel %vm497, %v478, 0.0
        %v510 = vadd.f32 %v508, %v509
        %v511 = vsel %vm497, %v486, 0.0
        %v512 = vadd.f32 %v510, %v511
        %v513 = vsel %vm491, %v471, 0.0
        %v514 = vsel %vm491, %v479, 0.0
        %v515 = vadd.f32 %v513, %v514
        %v516 = vsel %vm491, %v487, 0.0
        %v517 = vadd.f32 %v515, %v516
        %v518 = vsel %vm497, %v472, 0.0
        %v519 = vsel %vm497, %v480, 0.0
        %v520 = vadd.f32 %v518, %v519
        %v521 = vsel %vm497, %v488, 0.0
        %v522 = vadd.f32 %v520, %v521
        %v523 = vsel %vm491, %v473, 0.0
        %v524 = vsel %vm491, %v481, 0.0
        %v525 = vadd.f32 %v523, %v524
        %v526 = vsel %vm491, %v489, 0.0
        %v527 = vadd.f32 %v525, %v526
        %v528 = vsel %vm497, %v474, 0.0
        %v529 = vsel %vm497, %v482, 0.0
        %v530 = vadd.f32 %v528, %v529
        %v531 = vsel %vm497, %v490, 0.0
        %v532 = vadd.f32 %v530, %v531
        %v533 = vrcp.pop 3.0
        %v534 = vmul.f32 3.0, %v533
        %v535 = vsub.f32 1.0, %v534
        %v536 = vmul.f32 %v533, %v535
        %v537 = vadd.f32 %v533, %v536
        %vm538 = vweird.f32 %v533
        %v539 = vsel %vm538, %v533, %v537
        %v540 = vmul.f32 %v496, %v539
        %v541 = vmul.f32 %v502, %v539
        %v542 = vmul.f32 %v507, %v539
        %v543 = vmul.f32 %v512, %v539
        %v544 = vmul.f32 %v517, %v539
        %v545 = vmul.f32 %v522, %v539
        %v546 = vmul.f32 %v527, %v539
        %v547 = vmul.f32 %v532, %v539
        %v548 = vsub.f32 0.0, %v540
        %v549 = vsub.f32 0.0, %v541
        %v550 = vsub.f32 0.0, %v542
        %v551 = vsub.f32 0.0, %v543
        %v552 = vsub.f32 0.0, %v544
        %v553 = vsub.f32 0.0, %v545
        %v554 = vsub.f32 0.0, %v546
        %v555 = vsub.f32 0.0, %v547
        %v556 = vmul.f32 %v548, 1.442695
        %v557 = vpow.pop %v556
        %v558 = vmul.f32 %v549, 1.442695
        %v559 = vpow.pop %v558
        %v560 = vmul.f32 %v550, 1.442695
        %v561 = vpow.pop %v560
        %v562 = vmul.f32 %v551, 1.442695
        %v563 = vpow.pop %v562
        %v564 = vmul.f32 %v552, 1.442695
        %v565 = vpow.pop %v564
        %v566 = vmul.f32 %v553, 1.442695
        %v567 = vpow.pop %v566
        %v568 = vmul.f32 %v554, 1.442695
        %v569 = vpow.pop %v568
        %v570 = vmul.f32 %v555, 1.442695
        %v571 = vpow.pop %v570
        %v588 = vrot.slane %v318, 1
        %v589 = vrot.slane %v319, 1
        %v590 = vsel %vm382, %v588, %v589
        %v591 = vrot.slane %v320, 1
        %v592 = vrot.slane %v321, 1
        %v593 = vsel %vm382, %v591, %v592
        %v594 = vrot.slane %v322, 1
        %v595 = vrot.slane %v323, 1
        %v596 = vsel %vm382, %v594, %v595
        %v597 = vrot.slane %v324, 1
        %v598 = vrot.slane %v325, 1
        %v599 = vsel %vm382, %v597, %v598
        %v600 = vrot.slane %v326, 1
        %v601 = vrot.slane %v327, 1
        %v602 = vsel %vm382, %v600, %v601
        %v603 = vrot.slane %v328, 1
        %v604 = vrot.slane %v329, 1
        %v605 = vsel %vm382, %v603, %v604
        %v606 = vrot.slane %v330, 1
        %v607 = vrot.slane %v331, 1
        %v608 = vsel %vm382, %v606, %v607
        %v609 = vrot.slane %v332, 1
        %v610 = vrot.slane %v333, 1
        %v611 = vsel %vm382, %v609, %v610
        %v628 = vsub.f32 %v318, %v590
        %v629 = vsub.f32 %v319, %v589
        %v630 = vsub.f32 %v320, %v593
        %v631 = vsub.f32 %v321, %v592
        %v632 = vsub.f32 %v322, %v596
        %v633 = vsub.f32 %v323, %v595
        %v634 = vsub.f32 %v324, %v599
        %v635 = vsub.f32 %v325, %v598
        %v636 = vsub.f32 %v326, %v602
        %v637 = vsub.f32 %v327, %v601
        %v638 = vsub.f32 %v328, %v605
        %v639 = vsub.f32 %v329, %v604
        %v640 = vsub.f32 %v330, %v608
        %v641 = vsub.f32 %v331, %v607
        %v642 = vsub.f32 %v332, %v611
        %v643 = vsub.f32 %v333, %v610
        %v644 = vand.u32 2147483647, %v628
        %v645 = vand.u32 2147483647, %v629
        %v646 = vand.u32 2147483647, %v630
        %v647 = vand.u32 2147483647, %v631
        %v648 = vand.u32 2147483647, %v632
        %v649 = vand.u32 2147483647, %v633
        %v650 = vand.u32 2147483647, %v634
        %v651 = vand.u32 2147483647, %v635
        %v652 = vand.u32 2147483647, %v636
        %v653 = vand.u32 2147483647, %v637
        %v654 = vand.u32 2147483647, %v638
        %v655 = vand.u32 2147483647, %v639
        %v656 = vand.u32 2147483647, %v640
        %v657 = vand.u32 2147483647, %v641
        %v658 = vand.u32 2147483647, %v642
        %v659 = vand.u32 2147483647, %v643
        %v660 = vsel %vm491, %v644, 0.0
        %v661 = vsel %vm491, %v652, 0.0
        %v662 = vadd.f32 %v660, %v661
        %v663 = vsel %vm497, %v645, 0.0
        %v664 = vsel %vm497, %v653, 0.0
        %v665 = vadd.f32 %v663, %v664
        %v666 = vsel %vm491, %v646, 0.0
        %v667 = vsel %vm491, %v654, 0.0
        %v668 = vadd.f32 %v666, %v667
        %v669 = vsel %vm497, %v647, 0.0
        %v670 = vsel %vm497, %v655, 0.0
        %v671 = vadd.f32 %v669, %v670
        %v672 = vsel %vm491, %v648, 0.0
        %v673 = vsel %vm491, %v656, 0.0
        %v674 = vadd.f32 %v672, %v673
        %v675 = vsel %vm497, %v649, 0.0
        %v676 = vsel %vm497, %v657, 0.0
        %v677 = vadd.f32 %v675, %v676
        %v678 = vsel %vm491, %v650, 0.0
        %v679 = vsel %vm491, %v658, 0.0
        %v680 = vadd.f32 %v678, %v679
        %v681 = vsel %vm497, %v651, 0.0
        %v682 = vsel %vm497, %v659, 0.0
        %v683 = vadd.f32 %v681, %v682
        %v684 = vld [vmem:[%s297] sm:$0xff]
        %v685 = vld [vmem:[%s297 + $0x8] sm:$0x7f]
        %v686 = vmul.f32 %v662, %v557
        %v687 = vmul.f32 %v665, %v559
        %v688 = vmul.f32 %v668, %v561
        %v689 = vmul.f32 %v671, %v563
        %v690 = vmul.f32 %v674, %v565
        %v691 = vmul.f32 %v677, %v567
        %v692 = vmul.f32 %v680, %v569
        %v693 = vmul.f32 %v683, %v571
        %v694 = vsel %vm491, %v686, 0.0
        %v695 = vsel %vm491, %v688, 0.0
        %v696 = vadd.f32 %v694, %v695
        %v697 = vsel %vm491, %v690, 0.0
        %v698 = vadd.f32 %v696, %v697
        %v699 = vsel %vm491, %v692, 0.0
        %v700 = vadd.f32 %v698, %v699
        %v701 = vsel %vm497, %v687, 0.0
        %v702 = vsel %vm497, %v689, 0.0
        %v703 = vadd.f32 %v701, %v702
        %v704 = vsel %vm497, %v691, 0.0
        %v705 = vadd.f32 %v703, %v704
        %v706 = vsel %vm497, %v693, 0.0
        %v707 = vadd.f32 %v705, %v706
        %v708 = vadd.f32 %v684, %v700
        %v709 = vadd.f32 %v685, %v707
        %710 = vst.msk [vmem:[%s297] sm:$0xff] %vm491, %v708
        %711 = vst.msk [vmem:[%s297 + $0x8] sm:$0x7f] %vm497, %v709
        %712 = vrot.lane.b32.xlu0 %v334, 127
        %v713 = vpop.permute.xlu0 %712
        %714 = vrot.lane.b32.xlu0 %v335, 127
        %v715 = vpop.permute.xlu0 %714
        %716 = vrot.lane.b32.xlu0 %v336, 127
        %v717 = vpop.permute.xlu0 %716
        %718 = vrot.lane.b32.xlu0 %v337, 127
        %v719 = vpop.permute.xlu0 %718
        %720 = vrot.lane.b32.xlu0 %v338, 127
        %v721 = vpop.permute.xlu0 %720
        %722 = vrot.lane.b32.xlu0 %v339, 127
        %v723 = vpop.permute.xlu0 %722
        %724 = vrot.lane.b32.xlu0 %v340, 127
        %v725 = vpop.permute.xlu0 %724
        %726 = vrot.lane.b32.xlu0 %v341, 127
        %v727 = vpop.permute.xlu0 %726
        %728 = vrot.lane.b32.xlu0 %v342, 127
        %v729 = vpop.permute.xlu0 %728
        %730 = vrot.lane.b32.xlu0 %v343, 127
        %v731 = vpop.permute.xlu0 %730
        %732 = vrot.lane.b32.xlu0 %v344, 127
        %v733 = vpop.permute.xlu0 %732
        %734 = vrot.lane.b32.xlu0 %v345, 127
        %v735 = vpop.permute.xlu0 %734
        %736 = vrot.lane.b32.xlu0 %v346, 127
        %v737 = vpop.permute.xlu0 %736
        %738 = vrot.lane.b32.xlu0 %v347, 127
        %v739 = vpop.permute.xlu0 %738
        %740 = vrot.lane.b32.xlu0 %v348, 127
        %v741 = vpop.permute.xlu0 %740
        %742 = vrot.lane.b32.xlu0 %v349, 127
        %v743 = vpop.permute.xlu0 %742
        %744 = vrot.lane.b32.xlu0 %v350, 127
        %v745 = vpop.permute.xlu0 %744
        %746 = vrot.lane.b32.xlu0 %v351, 127
        %v747 = vpop.permute.xlu0 %746
        %748 = vrot.lane.b32.xlu0 %v352, 127
        %v749 = vpop.permute.xlu0 %748
        %750 = vrot.lane.b32.xlu0 %v353, 127
        %v751 = vpop.permute.xlu0 %750
        %752 = vrot.lane.b32.xlu0 %v354, 127
        %v753 = vpop.permute.xlu0 %752
        %754 = vrot.lane.b32.xlu0 %v355, 127
        %v755 = vpop.permute.xlu0 %754
        %756 = vrot.lane.b32.xlu0 %v356, 127
        %v757 = vpop.permute.xlu0 %756
        %758 = vrot.lane.b32.xlu0 %v357, 127
        %v759 = vpop.permute.xlu0 %758
        %v784 = vsub.f32 %v334, %v713
        %v785 = vsub.f32 %v335, %v715
        %v786 = vsub.f32 %v336, %v717
        %v787 = vsub.f32 %v337, %v719
        %v788 = vsub.f32 %v338, %v721
        %v789 = vsub.f32 %v339, %v723
        %v790 = vsub.f32 %v340, %v725
        %v791 = vsub.f32 %v341, %v727
        %v792 = vsub.f32 %v342, %v729
        %v793 = vsub.f32 %v343, %v731
        %v794 = vsub.f32 %v344, %v733
        %v795 = vsub.f32 %v345, %v735
        %v796 = vsub.f32 %v346, %v737
        %v797 = vsub.f32 %v347, %v739
        %v798 = vsub.f32 %v348, %v741
        %v799 = vsub.f32 %v349, %v743
        %v800 = vsub.f32 %v350, %v745
        %v801 = vsub.f32 %v351, %v747
        %v802 = vsub.f32 %v352, %v749
        %v803 = vsub.f32 %v353, %v751
        %v804 = vsub.f32 %v354, %v753
        %v805 = vsub.f32 %v355, %v755
        %v806 = vsub.f32 %v356, %v757
        %v807 = vsub.f32 %v357, %v759
        %v808 = vand.u32 2147483647, %v784
        %v809 = vand.u32 2147483647, %v785
        %v810 = vand.u32 2147483647, %v786
        %v811 = vand.u32 2147483647, %v787
        %v812 = vand.u32 2147483647, %v788
        %v813 = vand.u32 2147483647, %v789
        %v814 = vand.u32 2147483647, %v790
        %v815 = vand.u32 2147483647, %v791
        %v816 = vand.u32 2147483647, %v792
        %v817 = vand.u32 2147483647, %v793
        %v818 = vand.u32 2147483647, %v794
        %v819 = vand.u32 2147483647, %v795
        %v820 = vand.u32 2147483647, %v796
        %v821 = vand.u32 2147483647, %v797
        %v822 = vand.u32 2147483647, %v798
        %v823 = vand.u32 2147483647, %v799
        %v824 = vand.u32 2147483647, %v800
        %v825 = vand.u32 2147483647, %v801
        %v826 = vand.u32 2147483647, %v802
        %v827 = vand.u32 2147483647, %v803
        %v828 = vand.u32 2147483647, %v804
        %v829 = vand.u32 2147483647, %v805
        %v830 = vand.u32 2147483647, %v806
        %v831 = vand.u32 2147483647, %v807
        %vm832 = vcmask 121856
        %v833 = vsel %vm832, %v808, 0.0
        %v834 = vsel %vm832, %v816, 0.0
        %v835 = vadd.f32 %v833, %v834
        %v836 = vsel %vm832, %v824, 0.0
        %v837 = vadd.f32 %v835, %v836
        %v838 = vsel %vm832, %v809, 0.0
        %v839 = vsel %vm832, %v817, 0.0
        %v840 = vadd.f32 %v838, %v839
        %v841 = vsel %vm832, %v825, 0.0
        %v842 = vadd.f32 %v840, %v841
        %v843 = vsel %vm832, %v810, 0.0
        %v844 = vsel %vm832, %v818, 0.0
        %v845 = vadd.f32 %v843, %v844
        %v846 = vsel %vm832, %v826, 0.0
        %v847 = vadd.f32 %v845, %v846
        %v848 = vsel %vm832, %v811, 0.0
        %v849 = vsel %vm832, %v819, 0.0
        %v850 = vadd.f32 %v848, %v849
        %v851 = vsel %vm832, %v827, 0.0
        %v852 = vadd.f32 %v850, %v851
        %v853 = vsel %vm832, %v812, 0.0
        %v854 = vsel %vm832, %v820, 0.0
        %v855 = vadd.f32 %v853, %v854
        %v856 = vsel %vm832, %v828, 0.0
        %v857 = vadd.f32 %v855, %v856
        %v858 = vsel %vm832, %v813, 0.0
        %v859 = vsel %vm832, %v821, 0.0
        %v860 = vadd.f32 %v858, %v859
        %v861 = vsel %vm832, %v829, 0.0
        %v862 = vadd.f32 %v860, %v861
        %v863 = vsel %vm832, %v814, 0.0
        %v864 = vsel %vm832, %v822, 0.0
        %v865 = vadd.f32 %v863, %v864
        %v866 = vsel %vm832, %v830, 0.0
        %v867 = vadd.f32 %v865, %v866
        %v868 = vsel %vm832, %v815, 0.0
        %v869 = vsel %vm832, %v823, 0.0
        %v870 = vadd.f32 %v868, %v869
        %v871 = vsel %vm832, %v831, 0.0
        %v872 = vadd.f32 %v870, %v871
        %v873 = vmul.f32 %v837, %v539
        %v874 = vmul.f32 %v842, %v539
        %v875 = vmul.f32 %v847, %v539
        %v876 = vmul.f32 %v852, %v539
        %v877 = vmul.f32 %v857, %v539
        %v878 = vmul.f32 %v862, %v539
        %v879 = vmul.f32 %v867, %v539
        %v880 = vmul.f32 %v872, %v539
        %v881 = vsub.f32 0.0, %v873
        %v882 = vsub.f32 0.0, %v874
        %v883 = vsub.f32 0.0, %v875
        %v884 = vsub.f32 0.0, %v876
        %v885 = vsub.f32 0.0, %v877
        %v886 = vsub.f32 0.0, %v878
        %v887 = vsub.f32 0.0, %v879
        %v888 = vsub.f32 0.0, %v880
        %v889 = vmul.f32 %v881, 1.442695
        %v890 = vpow.pop %v889
        %v891 = vmul.f32 %v882, 1.442695
        %v892 = vpow.pop %v891
        %v893 = vmul.f32 %v883, 1.442695
        %v894 = vpow.pop %v893
        %v895 = vmul.f32 %v884, 1.442695
        %v896 = vpow.pop %v895
        %v897 = vmul.f32 %v885, 1.442695
        %v898 = vpow.pop %v897
        %v899 = vmul.f32 %v886, 1.442695
        %v900 = vpow.pop %v899
        %v901 = vmul.f32 %v887, 1.442695
        %v902 = vpow.pop %v901
        %v903 = vmul.f32 %v888, 1.442695
        %v904 = vpow.pop %v903
        %905 = vrot.lane.b32.xlu0 %v318, 127
        %v906 = vpop.permute.xlu0 %905
        %907 = vrot.lane.b32.xlu0 %v319, 127
        %v908 = vpop.permute.xlu0 %907
        %909 = vrot.lane.b32.xlu0 %v320, 127
        %v910 = vpop.permute.xlu0 %909
        %911 = vrot.lane.b32.xlu0 %v321, 127
        %v912 = vpop.permute.xlu0 %911
        %913 = vrot.lane.b32.xlu0 %v322, 127
        %v914 = vpop.permute.xlu0 %913
        %915 = vrot.lane.b32.xlu0 %v323, 127
        %v916 = vpop.permute.xlu0 %915
        %917 = vrot.lane.b32.xlu0 %v324, 127
        %v918 = vpop.permute.xlu0 %917
        %919 = vrot.lane.b32.xlu0 %v325, 127
        %v920 = vpop.permute.xlu0 %919
        %921 = vrot.lane.b32.xlu0 %v326, 127
        %v922 = vpop.permute.xlu0 %921
        %923 = vrot.lane.b32.xlu0 %v327, 127
        %v924 = vpop.permute.xlu0 %923
        %925 = vrot.lane.b32.xlu0 %v328, 127
        %v926 = vpop.permute.xlu0 %925
        %927 = vrot.lane.b32.xlu0 %v329, 127
        %v928 = vpop.permute.xlu0 %927
        %929 = vrot.lane.b32.xlu0 %v330, 127
        %v930 = vpop.permute.xlu0 %929
        %931 = vrot.lane.b32.xlu0 %v331, 127
        %v932 = vpop.permute.xlu0 %931
        %933 = vrot.lane.b32.xlu0 %v332, 127
        %v934 = vpop.permute.xlu0 %933
        %935 = vrot.lane.b32.xlu0 %v333, 127
        %v936 = vpop.permute.xlu0 %935
        %v953 = vsub.f32 %v318, %v906
        %v954 = vsub.f32 %v319, %v908
        %v955 = vsub.f32 %v320, %v910
        %v956 = vsub.f32 %v321, %v912
        %v957 = vsub.f32 %v322, %v914
        %v958 = vsub.f32 %v323, %v916
        %v959 = vsub.f32 %v324, %v918
        %v960 = vsub.f32 %v325, %v920
        %v961 = vsub.f32 %v326, %v922
        %v962 = vsub.f32 %v327, %v924
        %v963 = vsub.f32 %v328, %v926
        %v964 = vsub.f32 %v329, %v928
        %v965 = vsub.f32 %v330, %v930
        %v966 = vsub.f32 %v331, %v932
        %v967 = vsub.f32 %v332, %v934
        %v968 = vsub.f32 %v333, %v936
        %v969 = vand.u32 2147483647, %v953
        %v970 = vand.u32 2147483647, %v954
        %v971 = vand.u32 2147483647, %v955
        %v972 = vand.u32 2147483647, %v956
        %v973 = vand.u32 2147483647, %v957
        %v974 = vand.u32 2147483647, %v958
        %v975 = vand.u32 2147483647, %v959
        %v976 = vand.u32 2147483647, %v960
        %v977 = vand.u32 2147483647, %v961
        %v978 = vand.u32 2147483647, %v962
        %v979 = vand.u32 2147483647, %v963
        %v980 = vand.u32 2147483647, %v964
        %v981 = vand.u32 2147483647, %v965
        %v982 = vand.u32 2147483647, %v966
        %v983 = vand.u32 2147483647, %v967
        %v984 = vand.u32 2147483647, %v968
        %v985 = vsel %vm832, %v969, 0.0
        %v986 = vsel %vm832, %v977, 0.0
        %v987 = vadd.f32 %v985, %v986
        %v988 = vsel %vm832, %v970, 0.0
        %v989 = vsel %vm832, %v978, 0.0
        %v990 = vadd.f32 %v988, %v989
        %v991 = vsel %vm832, %v971, 0.0
        %v992 = vsel %vm832, %v979, 0.0
        %v993 = vadd.f32 %v991, %v992
        %v994 = vsel %vm832, %v972, 0.0
        %v995 = vsel %vm832, %v980, 0.0
        %v996 = vadd.f32 %v994, %v995
        %v997 = vsel %vm832, %v973, 0.0
        %v998 = vsel %vm832, %v981, 0.0
        %v999 = vadd.f32 %v997, %v998
        %v1000 = vsel %vm832, %v974, 0.0
        %v1001 = vsel %vm832, %v982, 0.0
        %v1002 = vadd.f32 %v1000, %v1001
        %v1003 = vsel %vm832, %v975, 0.0
        %v1004 = vsel %vm832, %v983, 0.0
        %v1005 = vadd.f32 %v1003, %v1004
        %v1006 = vsel %vm832, %v976, 0.0
        %v1007 = vsel %vm832, %v984, 0.0
        %v1008 = vadd.f32 %v1006, %v1007
        %v1009 = vld [vmem:[%s306] sm:$0xff]
        %v1010 = vld [vmem:[%s306 + $0x8] sm:$0xff]
        %v1011 = vmul.f32 %v987, %v890
        %v1012 = vmul.f32 %v990, %v892
        %v1013 = vmul.f32 %v993, %v894
        %v1014 = vmul.f32 %v996, %v896
        %v1015 = vmul.f32 %v999, %v898
        %v1016 = vmul.f32 %v1002, %v900
        %v1017 = vmul.f32 %v1005, %v902
        %v1018 = vmul.f32 %v1008, %v904
        %v1019 = vsel %vm832, %v1011, 0.0
        %v1020 = vsel %vm832, %v1013, 0.0
        %v1021 = vadd.f32 %v1019, %v1020
        %v1022 = vsel %vm832, %v1015, 0.0
        %v1023 = vadd.f32 %v1021, %v1022
        %v1024 = vsel %vm832, %v1017, 0.0
        %v1025 = vadd.f32 %v1023, %v1024
        %v1026 = vsel %vm832, %v1012, 0.0
        %v1027 = vsel %vm832, %v1014, 0.0
        %v1028 = vadd.f32 %v1026, %v1027
        %v1029 = vsel %vm832, %v1016, 0.0
        %v1030 = vadd.f32 %v1028, %v1029
        %v1031 = vsel %vm832, %v1018, 0.0
        %v1032 = vadd.f32 %v1030, %v1031
        %v1033 = vadd.f32 %v1009, %v1025
        %v1034 = vadd.f32 %v1010, %v1032
        %1035 = vst.msk [vmem:[%s306] sm:$0xff] %vm832, %v1033
        %1036 = vst.msk [vmem:[%s306 + $0x8] sm:$0xff] %vm832, %v1034
        %p1037 = scmp.lt.s32.totalorder %s26, 1
        %s1038 = scalar_select %p1037, %s26, 1
        %p1039 = scmp.lt.s32.totalorder %s27, 0
        %s1040 = scalar_select %p1039, %s27, 0
        %s1041 = smul.addr %s1040, 2
        %s1042 = smul.addr %s1038, 2
        %s1043 = sadd.s32 %s1041, %s1042
        %s1044 = smul.addr %s1043, 8
        %s1045 = scalar_lea.vmem %s2, %s1044
        %p1046 = scmp.lt.s32.totalorder %s26, 1
        %s1047 = scalar_select %p1046, %s26, 1
        %p1048 = scmp.lt.s32.totalorder %s27, 0
        %s1049 = scalar_select %p1048, %s27, 0
        %s1050 = smul.addr %s1049, 2
        %s1051 = smul.addr %s1047, 2
        %s1052 = sadd.s32 %s1050, %s1051
        %s1053 = smul.addr %s1052, 8
        %s1054 = scalar_lea.vmem %s3, %s1053
        // Predicated region
        $region41: #{smooth_loss.1} parent=27 // pred_check
          %p1055 = pneg %p120
        $region42: #{smooth_loss.1} parent=27 // pred_check_branch
          %1057 = sbr.rel (%p1055) target = $region44
        $region43: #{smooth_loss.1} parent=27 // pred_region
          _
        $region44: #{smooth_loss.1} parent=27 // pred_fallthru
          _
        // Predicated region
        $region45: #{smooth_loss.1} parent=27 // pred_check
          %p1058 = pneg %p148
        $region46: #{smooth_loss.1} parent=27 // pred_check_branch
          %1060 = sbr.rel (%p1058) target = $region48
        $region47: #{smooth_loss.1} parent=27 // pred_region
          _
        $region48: #{smooth_loss.1} parent=27 // pred_fallthru
          _
      $region28: #{smooth_loss.1} parent=5 // pred_fallthru
        _
      %p1061 = scmp.le.s32.totalorder 2, %s16
      // Predicated region
      $region49: #{smooth_loss.1} parent=5 // pred_check
        %p1062 = pneg %p1061
      $region50: #{smooth_loss.1} parent=5 // pred_check_branch
        %1064 = sbr.rel (%p1062) target = $region52
      $region51: #{smooth_loss.1} parent=5 // pred_region
        %s1065 = ssub.s32 %s16, 2
        // Predicated region
        $region53: #{smooth_loss.1} parent=51 // pred_check
          %p1066 = pneg %p126
        $region54: #{smooth_loss.1} parent=51 // pred_check_branch
          %1068 = sbr.rel (%p1066) target = $region56
        $region55: #{smooth_loss.1} parent=51 // pred_region
          %p1069 = scmp.lt.s32.totalorder %s29, 1
          %s1070 = scalar_select %p1069, %s29, 1
          %p1071 = scmp.lt.s32.totalorder %s30, 0
          %s1072 = scalar_select %p1071, %s30, 0
          %s1073 = smul.addr %s1072, 2
          %s1074 = smul.addr %s1070, 2
          %s1075 = sadd.s32 %s1073, %s1074
          %s1076 = smul.addr %s1075, 8
          %s1077 = scalar_lea.vmem %s2, %s1076
        $region56: #{smooth_loss.1} parent=51 // pred_fallthru
          _
        // Predicated region
        $region57: #{smooth_loss.1} parent=51 // pred_check
          %p1078 = pneg %p154
        $region58: #{smooth_loss.1} parent=51 // pred_check_branch
          %1080 = sbr.rel (%p1078) target = $region60
        $region59: #{smooth_loss.1} parent=51 // pred_region
          %p1081 = scmp.lt.s32.totalorder %s29, 1
          %s1082 = scalar_select %p1081, %s29, 1
          %p1083 = scmp.lt.s32.totalorder %s30, 0
          %s1084 = scalar_select %p1083, %s30, 0
          %s1085 = smul.addr %s1084, 2
          %s1086 = smul.addr %s1082, 2
          %s1087 = sadd.s32 %s1085, %s1086
          %s1088 = smul.addr %s1087, 8
          %s1089 = scalar_lea.vmem %s3, %s1088
        $region60: #{smooth_loss.1} parent=51 // pred_fallthru
          _
      $region52: #{smooth_loss.1} parent=5 // pred_fallthru
        _
    $region6: #{smooth_loss.1} parent=1 // loop_footer
      %s20 = sadd.s32 1, %s16
    $region7: #{smooth_loss.1} parent=1 // loop_footer_branch
      %15 = sbr.rel target = $region3
    $region8: #{smooth_loss.1} parent=1 // loop_exit
      _
    %1090 = vsyncpa [#allocation3], 1
    %s1091 = scalar_lea.sflag [#allocation3], 1
    %1092 = vsyncpa %s1091, 1
    %1093 = vsyncpa [#allocation5], 1
    %s1094 = scalar_lea.sflag [#allocation5], 1
    %1095 = vsyncpa %s1094, 1

</llo_original>
